<compile_context>
chip_gen: v6e
topology: v6e:2x2x1
jax: 0.10.0
libtpu: 0.0.40
codegen_flags: <defaults>
</compile_context>

<pallas_src>
import jax
import jax.numpy as jnp
from jax.experimental import pallas as pl
from jax.experimental.pallas import tpu as pltpu


def _round_up(x, m):
    return (x + m - 1) // m * m


def _vmem_limit_bytes(working_set_bytes):
    # Headroom + clamp: keep well under v7x's 64 MiB physical per-TC VMEM for
    # the default tile sizes; v5e/v6e (128 MiB physical) have more slack.
    return int(min(96 * 2**20, max(32 * 2**20, working_set_bytes + (4 << 20))))


def _make_mean_kernel(c_len):
    """Pass 1: gather context embeddings from a VMEM-resident table and mean."""
    inv_c = 1.0 / float(c_len)

    def mean_kernel(ctx_ref,    # SMEM (B_pad*C,) int32   (scalar prefetch, flat)
                    emb_ref,    # VMEM (V, D) f32         (full table, resident)
                    mean_ref,   # VMEM (b_tile, D) bf16   (output tile)
                    acc_ref):   # VMEM scratch (b_tile, D) f32
        i = pl.program_id(0)
        b_tile = mean_ref.shape[0]
        base0 = i * b_tile * c_len

        def row_body(b, carry):
            base = base0 + b * c_len
            # Gather C rows (dynamic sublane slices of the resident table) and
            # accumulate in f32.
            row = emb_ref[pl.ds(ctx_ref[base], 1), :]
            for c in range(1, c_len):
                row = row + emb_ref[pl.ds(ctx_ref[base + c], 1), :]
            acc_ref[pl.ds(b, 1), :] = row
            return carry

        jax.lax.fori_loop(0, b_tile, row_body, 0)
        # Scale by 1/C and cast to bf16 exactly once per batch element.
        mean_ref[...] = (acc_ref[...] * inv_c).astype(mean_ref.dtype)

    return mean_kernel


def linear_kernel(mean_ref,   # VMEM (b_tile, D) bf16
                  w_ref,      # VMEM (D, v_tile) bf16   (pre-transposed weight)
                  b_ref,      # VMEM (1, v_tile) f32    (bias tile)
                  out_ref):   # VMEM (b_tile, v_tile) out_dtype
    logits = jnp.dot(mean_ref[...], w_ref[...],
                     preferred_element_type=jnp.float32)
    out_ref[...] = (logits + b_ref[...]).astype(out_ref.dtype)


def cbow_forward(context, emb_table, weight, bias, *,
                 b_tile=128, v_tile=512, out_dtype=jnp.float32):
    """context: (B, C) int token ids; emb_table: (V, D) f32;
    weight: (V, D) f32 (torch Linear layout); bias: (V,) f32.
    Returns (B, V) logits in out_dtype."""
    B, C = context.shape
    V, D = emb_table.shape

    # Clamp tile sizes for small problems; keep sublane/lane alignment.
    b_tile = min(b_tile, _round_up(B, 8))
    v_tile = min(v_tile, _round_up(V, 128))
    b_pad = _round_up(B, b_tile)
    v_pad = _round_up(V, v_tile)

    # Flat 1-D context in SMEM (padded rows use token 0 -> valid gather; the
    # corresponding output rows are sliced off below).
    ctx_flat = jnp.zeros((b_pad * C,), jnp.int32).at[: B * C].set(
        context.reshape(-1).astype(jnp.int32))

    emb_f32 = emb_table.astype(jnp.float32)

    # Weight pre-transposed to (D, V_pad) bf16: lane-dense MXU RHS, half the
    # HBM bytes of the dominant stream.  Padded columns are zero.
    w_t = jnp.zeros((D, v_pad), jnp.bfloat16).at[:, :V].set(
        weight.T.astype(jnp.bfloat16))
    bias_p = jnp.zeros((1, v_pad), jnp.float32).at[0, :V].set(
        bias.astype(jnp.float32))

    # ---------------- Pass 1: gather + mean -> (B_pad, D) bf16 ----------------
    n_b = b_pad // b_tile
    table_bytes = V * D * 4
    vmem1 = _vmem_limit_bytes(2 * table_bytes + 4 * b_tile * D * 4)

    means = pl.pallas_call(
        _make_mean_kernel(C),
        out_shape=jax.ShapeDtypeStruct((b_pad, D), jnp.bfloat16),
        grid_spec=pltpu.PrefetchScalarGridSpec(
            num_scalar_prefetch=1,
            grid=(n_b,),
            in_specs=[
                # Full-extent block, constant index -> table DMA'd once, stays
                # resident in VMEM for the whole grid.
                pl.BlockSpec((V, D), lambda i, ctx: (0, 0)),
            ],
            out_specs=pl.BlockSpec((b_tile, D), lambda i, ctx: (i, 0)),
            scratch_shapes=[pltpu.VMEM((b_tile, D), jnp.float32)],
        ),
        compiler_params=pltpu.CompilerParams(
            dimension_semantics=("parallel",),
            vmem_limit_bytes=vmem1,
        ),
    )(ctx_flat, emb_f32)

    # ---------------- Pass 2: tiled linear layer ------------------------------
    n_v = v_pad // v_tile
    out_bytes = jnp.dtype(out_dtype).itemsize
    vmem2 = _vmem_limit_bytes(
        2 * (D * v_tile * 2 + b_tile * D * 2 + v_tile * 4
             + b_tile * v_tile * out_bytes))

    out = pl.pallas_call(
        linear_kernel,
        out_shape=jax.ShapeDtypeStruct((b_pad, v_pad), out_dtype),
        grid_spec=pltpu.PrefetchScalarGridSpec(
            num_scalar_prefetch=0,
            # vocab axis OUTER, batch axis INNER: the weight tile (0, j) is
            # unchanged across consecutive steps, so it is fetched once per j.
            grid=(n_v, n_b),
            in_specs=[
                pl.BlockSpec((b_tile, D), lambda j, i: (i, 0)),   # means tile
                pl.BlockSpec((D, v_tile), lambda j, i: (0, j)),   # weight^T tile
                pl.BlockSpec((1, v_tile), lambda j, i: (0, j)),   # bias tile
            ],
            out_specs=pl.BlockSpec((b_tile, v_tile), lambda j, i: (i, j)),
        ),
        compiler_params=pltpu.CompilerParams(
            dimension_semantics=("parallel", "arbitrary"),
            vmem_limit_bytes=vmem2,
        ),
    )(means, w_t, bias_p)

    return out[:B, :V]


def cbow_reference(context, emb_table, weight, bias):
    # Mirrors the kernel's quantization: f32 gather/mean, mean cast to bf16,
    # weight streamed in bf16, f32 accumulate on the MXU.
    embeds = emb_table[context]                          # (B, C, D) f32
    mean_emb = jnp.mean(embeds, axis=1)                  # (B, D)
    mean_bf = mean_emb.astype(jnp.bfloat16).astype(jnp.float32)
    w_bf = weight.astype(jnp.bfloat16).astype(jnp.float32)
    return mean_bf @ w_bf.T + bias                       # (B, V)


if __name__ == "__main__":
    # Small but multi-tile at the default tile sizes:
    #   b_tile=128 -> b_pad=256 (2 batch tiles); v_tile=512 -> v_pad=1024
    #   (2 vocab tiles).
    vocab_size = 600
    embedding_dim = 32
    batch = 150
    context_len = 4

    key = jax.random.PRNGKey(0)
    k_emb, k_w, k_b, k_ctx = jax.random.split(key, 4)

    # Deterministic synthetic parameters mirroring the module's shapes:
    #   Embedding(vocab, dim) ~ N(0,1); Linear(dim, vocab): weight (V, D), bias (V,)
    emb_table = jax.random.normal(k_emb, (vocab_size, embedding_dim), jnp.float32)
    bound = 1.0 / (embedding_dim ** 0.5)
    weight = jax.random.uniform(k_w, (vocab_size, embedding_dim), jnp.float32,
                                minval=-bound, maxval=bound)
    bias = jax.random.uniform(k_b, (vocab_size,), jnp.float32,
                              minval=-bound, maxval=bound)

    context = jax.random.randint(k_ctx, (batch, context_len), 0, vocab_size,
                                 dtype=jnp.int32)

    out = cbow_forward(context, emb_table, weight, bias)
    out = jax.block_until_ready(out)

    ref = cbow_reference(context, emb_table, weight, bias)
    assert out.shape == (batch, vocab_size)
    max_err = float(jnp.max(jnp.abs(out - ref)))
    assert jnp.allclose(out, ref, atol=1e-2, rtol=1e-2), f"mismatch: {max_err}"

    print("KERNEL_OK")
</pallas_src>

<mosaic_0001>
module attributes {stable_mosaic.version = 11 : i64} {
  func.func @mean_kernel(%arg0: i32, %arg1: memref<1024xi32, #tpu.memory_space<smem>>, %arg2: memref<600x32xf32, #tpu.memory_space<vmem>>, %arg3: memref<128x32xbf16, #tpu.memory_space<vmem>>, %arg4: memref<128x32xf32, #tpu.memory_space<vmem>>) attributes {dimension_semantics = [#tpu.dimension_semantics<parallel>], iteration_bounds = array<i64: 2>, scalar_prefetch = 1 : i64, scratch_operands = 1 : i64, tpu.core_type = #tpu.core_type<tc>, window_params = [{pipeline_mode = #tpu.pipeline_mode<synchronous>, transform_indices = @transform_0, window_bounds = array<i64: 600, 32>}, {transform_indices = @transform_1, window_bounds = array<i64: 128, 32>}]} {
    %c128_i32 = arith.constant 128 : i32
    %0 = arith.muli %arg0, %c128_i32 : i32
    %c4_i32 = arith.constant 4 : i32
    %1 = arith.muli %0, %c4_i32 : i32
    %c0_i32 = arith.constant 0 : i32
    %c128_i32_0 = arith.constant 128 : i32
    %2 = arith.addi %c0_i32, %c128_i32_0 : i32
    %c1_i32 = arith.constant 1 : i32
    scf.for %arg5 = %c0_i32 to %2 step %c1_i32  : i32 {
      %c4_i32_5 = arith.constant 4 : i32
      %8 = arith.muli %arg5, %c4_i32_5 : i32
      %9 = arith.addi %1, %8 : i32
      %10 = arith.index_cast %9 : i32 to index
      %11 = memref.load %arg1[%10] : memref<1024xi32, #tpu.memory_space<smem>>
      %12 = arith.index_cast %11 : i32 to index
      %c0_6 = arith.constant 0 : index
      %13 = vector.load %arg2[%12, %c0_6] : memref<600x32xf32, #tpu.memory_space<vmem>>, vector<1x32xf32>
      %c1_i32_7 = arith.constant 1 : i32
      %14 = arith.addi %9, %c1_i32_7 : i32
      %15 = arith.index_cast %14 : i32 to index
      %16 = memref.load %arg1[%15] : memref<1024xi32, #tpu.memory_space<smem>>
      %17 = arith.index_cast %16 : i32 to index
      %c0_8 = arith.constant 0 : index
      %18 = vector.load %arg2[%17, %c0_8] : memref<600x32xf32, #tpu.memory_space<vmem>>, vector<1x32xf32>
      %19 = arith.addf %13, %18 : vector<1x32xf32>
      %c2_i32 = arith.constant 2 : i32
      %20 = arith.addi %9, %c2_i32 : i32
      %21 = arith.index_cast %20 : i32 to index
      %22 = memref.load %arg1[%21] : memref<1024xi32, #tpu.memory_space<smem>>
      %23 = arith.index_cast %22 : i32 to index
      %c0_9 = arith.constant 0 : index
      %24 = vector.load %arg2[%23, %c0_9] : memref<600x32xf32, #tpu.memory_space<vmem>>, vector<1x32xf32>
      %25 = arith.addf %19, %24 : vector<1x32xf32>
      %c3_i32 = arith.constant 3 : i32
      %26 = arith.addi %9, %c3_i32 : i32
      %27 = arith.index_cast %26 : i32 to index
      %28 = memref.load %arg1[%27] : memref<1024xi32, #tpu.memory_space<smem>>
      %29 = arith.index_cast %28 : i32 to index
      %c0_10 = arith.constant 0 : index
      %30 = vector.load %arg2[%29, %c0_10] : memref<600x32xf32, #tpu.memory_space<vmem>>, vector<1x32xf32>
      %31 = arith.addf %25, %30 : vector<1x32xf32>
      %32 = arith.index_cast %arg5 : i32 to index
      %c0_11 = arith.constant 0 : index
      %33 = vector.load %arg4[%32, %c0_11] : memref<128x32xf32, #tpu.memory_space<vmem>>, vector<1x32xf32>
      tpu.vector_store %arg4[%32, %c0_11], %31 {strides = array<i32>} : memref<128x32xf32, #tpu.memory_space<vmem>>, vector<1x32xf32>,
    }
    %c128_i32_1 = arith.constant 128 : i32
    %c0 = arith.constant 0 : index
    %c0_2 = arith.constant 0 : index
    %3 = vector.load %arg4[%c0, %c0_2] : memref<128x32xf32, #tpu.memory_space<vmem>>, vector<128x32xf32>
    %cst = arith.constant 2.500000e-01 : f32
    %4 = vector.broadcast %cst : f32 to vector<128x32xf32>
    %5 = arith.mulf %3, %4 : vector<128x32xf32>
    %6 = arith.truncf %5 : vector<128x32xf32> to vector<128x32xbf16>
    %c0_3 = arith.constant 0 : index
    %c0_4 = arith.constant 0 : index
    %7 = vector.load %arg3[%c0_3, %c0_4] : memref<128x32xbf16, #tpu.memory_space<vmem>>, vector<128x32xbf16>
    tpu.vector_store %arg3[%c0_3, %c0_4], %6 {strides = array<i32>} : memref<128x32xbf16, #tpu.memory_space<vmem>>, vector<128x32xbf16>,
    return
  }
  func.func @transform_0(%arg0: i32, %arg1: memref<1024xi32, #tpu.memory_space<smem>>) -> (i32, i32) {
    %c0_i32 = arith.constant 0 : i32
    %c0_i32_0 = arith.constant 0 : i32
    %c0_i32_1 = arith.constant 0 : i32
    return %c0_i32, %c0_i32_0 : i32, i32
  }
  func.func @transform_1(%arg0: i32, %arg1: memref<1024xi32, #tpu.memory_space<smem>>) -> (i32, i32) {
    %c0_i32 = arith.constant 0 : i32
    %c0_i32_0 = arith.constant 0 : i32
    return %arg0, %c0_i32 : i32, i32
  }
}

</mosaic_0001>

<llo_original>
// kernel: tpu_custom_call.1
$region0: #{tpu_custom_call.1}
  #allocation0 [shape = 'u32[]', space=smem, size = 0x4, offset = 0x4, fixed_abs, tag = 'smem constant byte address 0x4 - core index']
  #allocation1 [shape = 'u32[144,128]{1,0:T(1,128)}', space=vmem, size = 0x12000, scoped, tag = 'internal scratch']
  #allocation2 [shape = 'f32[128,32]{1,0:T(8,128)}', space=vmem, size = 0x10000, scoped, tag = 'scratch operand']
  #allocation3 [shape = 's32[1]{0}', space=sflag, size = 0x4, scoped, tag = 'scoped memory for tpu_custom_call.1']
  #allocation4 [shape = 'u8[4096]{0}', space=smem, size = 0x1000, scoped, tag = 'prefetched SMEM operand 0']
  %s0 = inlined_call_operand.vmem [shape: s32[1024], index: 0, kind: input, shape index: {}]
  %s1 = inlined_call_operand.vmem [shape: f32[600,32], index: 1, kind: input, shape index: {}]
  %s2 = inlined_call_operand.vmem [shape: bf16[256,32], index: 2, kind: output, shape index: {}]
  %s3 = sld [smem:[#allocation0]]
  $region44: #{tpu_custom_call.1} parent=0
    _
  %s5 = ssub.s32 1, %s3
  %s6 = scalar_select 0, %s5, %s3
  %s7 = sshll.u32 %s0, 4
  %s8 = int_to_ptr.vmem [resolvable:$true] %s7
  %10 = dma.vmem_to_smem %s8, 128, [#allocation4], [#allocation3]
  %11 = dma.done [#allocation3], 128
  %12 = sfence
  loop: start=0, step=1, limit=4
  $region2: #{tpu_custom_call.1} parent=0 // loop_pre_header
    _
  $region3: #{tpu_custom_call.1} parent=0 // loop_header
    %s14 = sphi 0, %s18
    %p15 = scmp.ge.s32.totalorder %s14, 4
    %s22 = sphi 0, %s22
    %s24 = sphi 0, %s22
    %s25 = sphi 0, %s24
    %s39 = sphi 0, %s25
    %s45 = sphi 0, %s47
    %s48 = sphi 0, %s45
    %s49 = sphi 0, %s48
    %s65 = sphi 0, %s49
  $region4: #{tpu_custom_call.1} parent=0 // loop_header_branch
    %17 = sbr.rel (%p15) target = $region8
  $region5: #{tpu_custom_call.1} parent=0 // loop_body
    %s19 = ssub.s32 %s14, 1
    %s20 = ssub.s32 %s14, 2
    %s21 = sadd.s32 %s14, 1
    %s23 = sadd.s32 %s22, 1
    %p26 = scmp.eq.s32.totalorder %s14, 1
    %p27 = scmp.ne.s32.totalorder %s22, %s24
    %p28 = scmp.eq.s32.totalorder %s14, 0
    %p29 = por %p27, %p28
    %p30 = scmp.ne.s32.totalorder %s22, %s24
    %p31 = scmp.eq.s32.totalorder %s19, 1
    %p32 = por %p30, %p31
    %p33 = scmp.ne.s32.totalorder %s24, %s25
    %p34 = scmp.eq.s32.totalorder %s19, 0
    %p35 = por %p33, %p34
    %p36 = scmp.ne.s32.totalorder %s24, %s25
    %p37 = scmp.eq.s32.totalorder %s20, 1
    %p38 = por %p36, %p37
    %p40 = scmp.ne.s32.totalorder %s25, %s39
    %p41 = scmp.eq.s32.totalorder %s20, 0
    %p42 = por %p40, %p41
    %s43 = ssub.s32 %s14, %s21
    %p44 = scmp.eq.s32.totalorder %s43, 0
    %s46 = sadd.s32 %s45, 1
    %s47 = scalar_select %p44, %s45, %s46
    %p50 = pneg %p44
    %p51 = scmp.eq.s32.totalorder %s14, 1
    %p52 = por %p50, %p51
    %p53 = scmp.ne.s32.totalorder %s45, %s48
    %p54 = scmp.eq.s32.totalorder %s14, 0
    %p55 = por %p53, %p54
    %p56 = scmp.ne.s32.totalorder %s45, %s48
    %p57 = scmp.eq.s32.totalorder %s19, 1
    %p58 = por %p56, %p57
    %p59 = scmp.ne.s32.totalorder %s48, %s49
    %p60 = scmp.eq.s32.totalorder %s19, 0
    %p61 = por %p59, %p60
    %p62 = scmp.ne.s32.totalorder %s48, %s49
    %p63 = scmp.eq.s32.totalorder %s20, 1
    %p64 = por %p62, %p63
    %p66 = scmp.ne.s32.totalorder %s49, %s65
    %p67 = scmp.eq.s32.totalorder %s20, 0
    %p68 = por %p66, %p67
    %p69 = scmp.le.s32.totalorder 1, %s14
    %p70 = scmp.lt.s32.totalorder %s14, 3
    %p71 = pnand %p69, %p70
    %p72 = pneg %p71
    // Predicated region
    $region9: #{tpu_custom_call.1} parent=5 // pred_check
      _
    $region10: #{tpu_custom_call.1} parent=5 // pred_check_branch
      %74 = sbr.rel (%p71) target = $region12
    $region11: #{tpu_custom_call.1} parent=5 // pred_region
      %s75 = ssub.s32 %s14, 1
      // Predicated region
      $region13: #{tpu_custom_call.1} parent=11 // pred_check
        %p76 = pneg %p35
      $region14: #{tpu_custom_call.1} parent=11 // pred_check_branch
        %78 = sbr.rel (%p76) target = $region16
      $region15: #{tpu_custom_call.1} parent=11 // pred_region
        _
      $region16: #{tpu_custom_call.1} parent=11 // pred_fallthru
        _
    $region12: #{tpu_custom_call.1} parent=5 // pred_fallthru
      _
    %p79 = scmp.lt.s32.totalorder %s14, 2
    // Predicated region
    $region17: #{tpu_custom_call.1} parent=5 // pred_check
      %p80 = pneg %p79
    $region18: #{tpu_custom_call.1} parent=5 // pred_check_branch
      %82 = sbr.rel (%p80) target = $region20
    $region19: #{tpu_custom_call.1} parent=5 // pred_region
      _
    $region20: #{tpu_custom_call.1} parent=5 // pred_fallthru
      _
    %p83 = scmp.le.s32.totalorder 1, %s14
    %p84 = scmp.lt.s32.totalorder %s14, 3
    %p85 = pnand %p83, %p84
    %p86 = pneg %p85
    // Predicated region
    $region21: #{tpu_custom_call.1} parent=5 // pred_check
      _
    $region22: #{tpu_custom_call.1} parent=5 // pred_check_branch
      %88 = sbr.rel (%p85) target = $region24
    $region23: #{tpu_custom_call.1} parent=5 // pred_region
      %s89 = ssub.s32 %s14, 1
      %p90 = pneg %p35
      %p91 = pneg %p32
      %p92 = pneg %p61
      %p93 = pneg %p58
      %s94 = smul.u32 16, %s19
      %p95 = scmp.lt.s32.totalorder %s94, 31
      %s96 = scalar_select %p95, %s94, 31
      %s97 = smul.addr %s96, 4
      %s98 = scalar_lea.vmem %s2, %s97
      %s99 = smul.u32 16, %s19
      %p100 = scmp.lt.s32.totalorder %s99, 31
      %s101 = scalar_select %p100, %s99, 31
      %s102 = smul.addr %s101, 4
      %s103 = scalar_lea.vmem %s2, %s102
      %s104 = smul.u32 16, %s19
      %s105 = smul.u32 %s19, 512
      loop: start=0, step=1, limit=128
      $region25: #{tpu_custom_call.1} parent=23 // loop_pre_header
        _
      $region26: #{tpu_custom_call.1} parent=23 // loop_header
        %s107 = sphi 0, %s111
        %p108 = scmp.ge.s32.totalorder %s107, 128
      $region27: #{tpu_custom_call.1} parent=23 // loop_header_branch
        %110 = sbr.rel (%p108) target = $region31
      $region28: #{tpu_custom_call.1} parent=23 // loop_body
        %s112 = smul.u32 %s107, 4
        %s113 = sadd.s32 %s105, %s112
        %s114 = sld [smem:[#allocation4 + %s113]]
        %s115 = scalar_lea.vmem %s1, %s114
        %v116 = vld [vmem:[%s115] sm:$0x1]
        %s117 = sadd.s32 %s113, 1
        %s118 = sld [smem:[#allocation4 + %s117]]
        %s119 = scalar_lea.vmem %s1, %s118
        %v120 = vld [vmem:[%s119] sm:$0x1]
        %v121 = vadd.f32 %v116, %v120
        %s122 = sadd.s32 %s113, 2
        %s123 = sld [smem:[#allocation4 + %s122]]
        %s124 = scalar_lea.vmem %s1, %s123
        %v125 = vld [vmem:[%s124] sm:$0x1]
        %v126 = vadd.f32 %v121, %v125
        %s127 = sadd.s32 %s113, 3
        %s128 = sld [smem:[#allocation4 + %s127]]
        %s129 = scalar_lea.vmem %s1, %s128
        %v130 = vld [vmem:[%s129] sm:$0x1]
        %v131 = vadd.f32 %v126, %v130
        %s132 = scalar_lea.vmem [#allocation2], %s107
        %vm133 = vcmask 253952
        %134 = vst.msk [vmem:[%s132] sm:$0x1] %vm133, %v131
      $region29: #{tpu_custom_call.1} parent=23 // loop_footer
        %s111 = sadd.s32 1, %s107
      $region30: #{tpu_custom_call.1} parent=23 // loop_footer_branch
        %106 = sbr.rel target = $region26
      $region31: #{tpu_custom_call.1} parent=23 // loop_exit
        _
      %v135 = vld [vmem:[#allocation2] sm:$0xff]
      %v136 = vld [vmem:[#allocation2 + $0x8] sm:$0xff]
      %v137 = vld [vmem:[#allocation2 + $0x10] sm:$0xff]
      %v138 = vld [vmem:[#allocation2 + $0x18] sm:$0xff]
      %v139 = vld [vmem:[#allocation2 + $0x20] sm:$0xff]
      %v140 = vld [vmem:[#allocation2 + $0x28] sm:$0xff]
      %v141 = vld [vmem:[#allocation2 + $0x30] sm:$0xff]
      %v142 = vld [vmem:[#allocation2 + $0x38] sm:$0xff]
      %v143 = vld [vmem:[#allocation2 + $0x40] sm:$0xff]
      %v144 = vld [vmem:[#allocation2 + $0x48] sm:$0xff]
      %v145 = vld [vmem:[#allocation2 + $0x50] sm:$0xff]
      %v146 = vld [vmem:[#allocation2 + $0x58] sm:$0xff]
      %v147 = vld [vmem:[#allocation2 + $0x60] sm:$0xff]
      %v148 = vld [vmem:[#allocation2 + $0x68] sm:$0xff]
      %v149 = vld [vmem:[#allocation2 + $0x70] sm:$0xff]
      %v150 = vld [vmem:[#allocation2 + $0x78] sm:$0xff]
      %v151 = vmul.f32 %v135, 0.25
      %v152 = vmul.f32 %v136, 0.25
      %v153 = vmul.f32 %v137, 0.25
      %v154 = vmul.f32 %v138, 0.25
      %v155 = vmul.f32 %v139, 0.25
      %v156 = vmul.f32 %v140, 0.25
      %v157 = vmul.f32 %v141, 0.25
      %v158 = vmul.f32 %v142, 0.25
      %v159 = vmul.f32 %v143, 0.25
      %v160 = vmul.f32 %v144, 0.25
      %v161 = vmul.f32 %v145, 0.25
      %v162 = vmul.f32 %v146, 0.25
      %v163 = vmul.f32 %v147, 0.25
      %v164 = vmul.f32 %v148, 0.25
      %v165 = vmul.f32 %v149, 0.25
      %v166 = vmul.f32 %v150, 0.25
      %v167 = vpack.c.bf16 %v152, %v151
      %v168 = vpack.c.bf16 %v154, %v153
      %v169 = vpack.c.bf16 %v156, %v155
      %v170 = vpack.c.bf16 %v158, %v157
      %v171 = vpack.c.bf16 %v160, %v159
      %v172 = vpack.c.bf16 %v162, %v161
      %v173 = vpack.c.bf16 %v164, %v163
      %v174 = vpack.c.bf16 %v166, %v165
      %v183 = vunpack.c.l.b16 %v167
      %v184 = vunpack.c.h.b16 %v167
      %v185 = vunpack.c.l.b16 %v168
      %v186 = vunpack.c.h.b16 %v168
      %v187 = vunpack.c.l.b16 %v169
      %v188 = vunpack.c.h.b16 %v169
      %v189 = vunpack.c.l.b16 %v170
      %v190 = vunpack.c.h.b16 %v170
      %v191 = vunpack.c.l.b16 %v171
      %v192 = vunpack.c.h.b16 %v171
      %v193 = vunpack.c.l.b16 %v172
      %v194 = vunpack.c.h.b16 %v172
      %v195 = vunpack.c.l.b16 %v173
      %v196 = vunpack.c.h.b16 %v173
      %v197 = vunpack.c.l.b16 %v174
      %v198 = vunpack.c.h.b16 %v174
      %v199 = vpack.c.b16 %v183, %v183
      %v200 = vpack.c.b16 %v184, %v184
      %v201 = vpack.c.b16 %v185, %v185
      %v202 = vpack.c.b16 %v186, %v186
      %v203 = vpack.c.b16 %v187, %v187
      %v204 = vpack.c.b16 %v188, %v188
      %v205 = vpack.c.b16 %v189, %v189
      %v206 = vpack.c.b16 %v190, %v190
      %v207 = vpack.c.b16 %v191, %v191
      %v208 = vpack.c.b16 %v192, %v192
      %v209 = vpack.c.b16 %v193, %v193
      %v210 = vpack.c.b16 %v194, %v194
      %v211 = vpack.c.b16 %v195, %v195
      %v212 = vpack.c.b16 %v196, %v196
      %v213 = vpack.c.b16 %v197, %v197
      %v214 = vpack.c.b16 %v198, %v198
      %vm231 = vcmask 257024
      %232 = vst.msk [vmem:[%s103] sm:$0xf] %vm231, %v199
      %233 = vst.msk [vmem:[%s103 + $0x4] sm:$0xf] %vm231, %v200
      %234 = vst.msk [vmem:[%s103 + $0x8] sm:$0xf] %vm231, %v201
      %235 = vst.msk [vmem:[%s103 + $0xc] sm:$0xf] %vm231, %v202
      %236 = vst.msk [vmem:[%s103 + $0x10] sm:$0xf] %vm231, %v203
      %237 = vst.msk [vmem:[%s103 + $0x14] sm:$0xf] %vm231, %v204
      %238 = vst.msk [vmem:[%s103 + $0x18] sm:$0xf] %vm231, %v205
      %239 = vst.msk [vmem:[%s103 + $0x1c] sm:$0xf] %vm231, %v206
      %240 = vst.msk [vmem:[%s103 + $0x20] sm:$0xf] %vm231, %v207
      %241 = vst.msk [vmem:[%s103 + $0x24] sm:$0xf] %vm231, %v208
      %242 = vst.msk [vmem:[%s103 + $0x28] sm:$0xf] %vm231, %v209
      %243 = vst.msk [vmem:[%s103 + $0x2c] sm:$0xf] %vm231, %v210
      %244 = vst.msk [vmem:[%s103 + $0x30] sm:$0xf] %vm231, %v211
      %245 = vst.msk [vmem:[%s103 + $0x34] sm:$0xf] %vm231, %v212
      %246 = vst.msk [vmem:[%s103 + $0x38] sm:$0xf] %vm231, %v213
      %247 = vst.msk [vmem:[%s103 + $0x3c] sm:$0xf] %vm231, %v214
      %s248 = smul.u32 16, %s19
      %p249 = scmp.lt.s32.totalorder %s248, 31
      %s250 = scalar_select %p249, %s248, 31
      %s251 = smul.addr %s250, 4
      %s252 = scalar_lea.vmem %s2, %s251
      // Predicated region
      $region32: #{tpu_custom_call.1} parent=23 // pred_check
        %p253 = pneg %p58
      $region33: #{tpu_custom_call.1} parent=23 // pred_check_branch
        %255 = sbr.rel (%p253) target = $region35
      $region34: #{tpu_custom_call.1} parent=23 // pred_region
        %s256 = smul.u32 16, %s19
      $region35: #{tpu_custom_call.1} parent=23 // pred_fallthru
        _
    $region24: #{tpu_custom_call.1} parent=5 // pred_fallthru
      _
    %p257 = scmp.le.s32.totalorder 2, %s14
    // Predicated region
    $region36: #{tpu_custom_call.1} parent=5 // pred_check
      %p258 = pneg %p257
    $region37: #{tpu_custom_call.1} parent=5 // pred_check_branch
      %260 = sbr.rel (%p258) target = $region39
    $region38: #{tpu_custom_call.1} parent=5 // pred_region
      %s261 = ssub.s32 %s14, 2
      // Predicated region
      $region40: #{tpu_custom_call.1} parent=38 // pred_check
        %p262 = pneg %p64
      $region41: #{tpu_custom_call.1} parent=38 // pred_check_branch
        %264 = sbr.rel (%p262) target = $region43
      $region42: #{tpu_custom_call.1} parent=38 // pred_region
        %s265 = smul.u32 16, %s20
        %p266 = scmp.lt.s32.totalorder %s265, 31
        %s267 = scalar_select %p266, %s265, 31
        %s268 = smul.addr %s267, 4
        %s269 = scalar_lea.vmem %s2, %s268
      $region43: #{tpu_custom_call.1} parent=38 // pred_fallthru
        _
    $region39: #{tpu_custom_call.1} parent=5 // pred_fallthru
      _
  $region6: #{tpu_custom_call.1} parent=0 // loop_footer
    %s18 = sadd.s32 1, %s14
  $region7: #{tpu_custom_call.1} parent=0 // loop_footer_branch
    %13 = sbr.rel target = $region3
  $region8: #{tpu_custom_call.1} parent=0 // loop_exit
    _

</llo_original>
